<compile_context>
chip_gen: v7x
topology: tpu7x:2x2x1
jax: 0.10.0
libtpu: 0.0.40
codegen_flags: <defaults>
</compile_context>

<pallas_src>
import jax
import jax.numpy as jnp
from jax import lax
from jax.experimental import pallas as pl
from jax.experimental.pallas import tpu as pltpu

GROUPSIZE = 64            # module only supports groupsize == 64
HALF_GROUP = GROUPSIZE // 2


def _round_up(x, mult):
    return (x + mult - 1) // mult * mult


def _dequant_dtype():
    """bf16 dequant arithmetic on v6e/v7x (bf16 VPU); f32 on v5e (f32-only VPU)."""
    try:
        kind = jax.devices()[0].device_kind.lower()
    except Exception:
        kind = ""
    if "v5 lite" in kind or "v5e" in kind or "v5lite" in kind:
        return jnp.float32
    return jnp.bfloat16


def pack_codes_nibble(codes):
    """Pack 3-bit codes (k, n) into (k//2, n) int8.

    Within each group of 64 rows, byte r (r in [0, 32)) of the group holds
      low  nibble = code[g*64 + r]
      high nibble = code[g*64 + 32 + r]
    so the in-kernel unpack is a tile-aligned concat (no cross-lane shuffles).
    The sign bit is never set (max byte value is 0x77).
    """
    k, n = codes.shape
    c = codes.astype(jnp.int32).reshape(k // GROUPSIZE, 2, HALF_GROUP, n)
    packed = c[:, 0] | (c[:, 1] << 4)
    return packed.reshape(k // 2, n).astype(jnp.int8)


def _make_kernel(tk, tn, chunk, wdt):
    gpc = chunk // GROUPSIZE          # groups per in-kernel K chunk
    n_chunks = tk // chunk

    def kernel(a_ref, qp_ref, s_ref, z_ref, e_ref, o_ref, acc_ref):
        kk = pl.program_id(2)

        @pl.when(kk == 0)
        def _():
            acc_ref[...] = jnp.zeros_like(acc_ref)

        # --- "+ z" offloaded to the MXU -------------------------------------
        # sum_k A[:, k] * z[k // 64, :]  ==  (A @ E) @ z  with E the constant
        # 0/1 per-group selector: two tiny matmuls on the (idle) MXU instead of
        # one VALU add (+ sublane broadcast of z) per dequantized weight element.
        gsum = jnp.dot(a_ref[...], e_ref[...],
                       preferred_element_type=jnp.float32)           # (tm, gpt_e)
        acc_ref[...] += jnp.dot(gsum.astype(jnp.bfloat16),
                                z_ref[...].astype(jnp.bfloat16),
                                preferred_element_type=jnp.float32)

        # --- dequant + matmul, in K chunks to bound VMEM temporaries --------
        def chunk_body(c, carry):
            p0 = pl.multiple_of(c * (chunk // 2), chunk // 2)
            k0 = pl.multiple_of(c * chunk, chunk)
            g0 = pl.multiple_of(c * gpc, gpc)

            packed = qp_ref[pl.ds(p0, chunk // 2), :].astype(jnp.int32)
            packed = packed.reshape(gpc, HALF_GROUP, tn)

            s_c = s_ref[pl.ds(g0, gpc), :].astype(wdt)[:, None, :]    # (gpc,1,tn)
            s16_c = s_c * 0.0625        # ">>4" folded into the scale (exact /16)

            w_lo = (packed & 0x07).astype(wdt) * s_c                  # rows g*64 + r
            w_hi = (packed & 0x70).astype(wdt) * s16_c                # rows g*64+32+r
            w = jnp.concatenate([w_lo, w_hi], axis=1).reshape(chunk, tn)

            a_c = a_ref[:, pl.ds(k0, chunk)]
            acc_ref[...] += jnp.dot(a_c, w.astype(jnp.bfloat16),
                                    preferred_element_type=jnp.float32)
            return carry

        lax.fori_loop(0, n_chunks, chunk_body, None)

        @pl.when(kk == pl.num_programs(2) - 1)
        def _():
            o_ref[...] = acc_ref[...].astype(o_ref.dtype)

    return kernel


def marlin_3bit_with_zero_matmul(A2d, q_packed, s, z, *, tn=None, tk=None, tm_max=256):
    """C = A2d @ (unpack(q_packed) * s + z), per-64-row groups. A2d: (m, k)."""
    m, k = A2d.shape
    kp, n = q_packed.shape
    assert kp * 2 == k and k % GROUPSIZE == 0
    assert s.shape == (k // GROUPSIZE, n) and z.shape == (k // GROUPSIZE, n)

    wdt = _dequant_dtype()

    # M tile: multiple of 16, large-ish so weight dequant is amortized over more
    # A rows on prefill shapes.
    tm = min(tm_max, _round_up(m, 16))
    m_pad = _round_up(m, tm)
    m_tiles = m_pad // tm

    # N tile: big (lane-dense stores, fewer grid steps), but keep >= 2 parallel
    # output tiles when there's a single M tile so both v7x TensorCores get work.
    if tn is None:
        cands = [c for c in (512, 256, 128) if n % c == 0]
        if not cands:
            tn = n      # lane-sparse fallback; module constraints make this rare
        else:
            tn = cands[0]
            if m_tiles == 1:
                for c in cands:
                    if n // c >= 2:
                        tn = c
                        break
    assert n % tn == 0

    # K tile: large (amortizes per-step overhead and acc read-modify-write); the
    # in-kernel chunk loop keeps dequant temporaries small regardless of tk.
    if tk is None:
        tk = next((c for c in (2048, 1024, 512) if k % c == 0), k)
    assert k % tk == 0 and tk % GROUPSIZE == 0
    gpt = tk // GROUPSIZE
    chunk = 512 if tk % 512 == 0 else tk

    a = A2d.astype(jnp.bfloat16)
    if m_pad != m:
        a = jnp.pad(a, ((0, m_pad - m), (0, 0)))
    s_w = s.astype(wdt)
    z_w = z.astype(wdt)

    # Per-group 0/1 selector E (tk, gpt_e) for the MXU "+z" offload; keep the
    # group dim a multiple of 8 (pad z with zero groups when tk == k is not).
    gpt_e = _round_up(gpt, 8)
    if gpt_e != gpt:
        assert k == tk, "group padding only supported for single-K-tile configs"
        z_w = jnp.pad(z_w, ((0, gpt_e - gpt), (0, 0)))
    e_mat = (jnp.arange(tk, dtype=jnp.int32)[:, None] // GROUPSIZE
             == jnp.arange(gpt_e, dtype=jnp.int32)[None, :]).astype(jnp.bfloat16)

    # Kernel writes a TPU-native dtype; f16 callers get one cheap cast outside.
    out_dtype = jnp.bfloat16 if A2d.dtype == jnp.float16 else A2d.dtype

    grid = (m_tiles, n // tn, k // tk)

    s_bytes = 4 if wdt == jnp.float32 else 2
    out_bytes = 4 if out_dtype == jnp.float32 else 2
    cost = pl.CostEstimate(
        flops=2 * m_pad * k * n,
        transcendentals=0,
        bytes_accessed=int(m_pad * k * 2 * (n // tn)
                           + ((k // 2) * n + 2 * (k // GROUPSIZE) * n * s_bytes) * m_tiles
                           + m_pad * n * out_bytes),
    )

    out = pl.pallas_call(
        _make_kernel(tk, tn, chunk, wdt),
        out_shape=jax.ShapeDtypeStruct((m_pad, n), out_dtype),
        grid_spec=pltpu.PrefetchScalarGridSpec(
            num_scalar_prefetch=0,
            grid=grid,
            in_specs=[
                pl.BlockSpec((tm, tk), lambda i, j, kk: (i, kk)),          # A
                pl.BlockSpec((tk // 2, tn), lambda i, j, kk: (kk, j)),     # packed q
                pl.BlockSpec((gpt, tn), lambda i, j, kk: (kk, j)),         # s
                pl.BlockSpec((gpt_e, tn), lambda i, j, kk: (kk, j)),       # z
                pl.BlockSpec((tk, gpt_e), lambda i, j, kk: (0, 0)),        # E selector
            ],
            out_specs=pl.BlockSpec((tm, tn), lambda i, j, kk: (i, j)),
            scratch_shapes=[pltpu.VMEM((tm, tn), jnp.float32)],
        ),
        compiler_params=pltpu.CompilerParams(
            dimension_semantics=("parallel", "parallel", "arbitrary"),
            vmem_limit_bytes=32 * 1024 * 1024),
        cost_estimate=cost,
    )(a, q_packed, s_w, z_w, e_mat)

    if m_pad != m:
        out = out[:m]
    if out.dtype != A2d.dtype:
        out = out.astype(A2d.dtype)
    return out


class Layer3bitWithZero:
    """JAX/Pallas port of the Marlin 3-bit grouped linear layer (no bias)."""

    def __init__(self, infeatures, outfeatures, groupsize=64, key=None):
        if groupsize != 64:
            raise ValueError("Only groupsize 64 is supported.")
        if infeatures % 64 != 0 or outfeatures % 64 != 0 or (
                infeatures % 256 != 0 and outfeatures % 256 != 0):
            raise ValueError("(64|infeatures & 256|outfeatures) or "
                             "(256|infeatures & 64|outfeatures)")
        if infeatures % groupsize != 0:
            raise ValueError("`infeatures` must be divisible by `groupsize`.")
        self.k = infeatures
        self.n = outfeatures
        self.groupsize = groupsize
        key = jax.random.PRNGKey(0) if key is None else key
        kq, ks, kz = jax.random.split(key, 3)
        # Deterministic synthetic "checkpoint": 3-bit codes + per-group scales/zeros.
        codes = jax.random.randint(kq, (self.k, self.n), 0, 8, dtype=jnp.int32)
        self.q_codes = codes.astype(jnp.int8)        # kept only for reference/tests
        self.q_packed = pack_codes_nibble(codes)     # (k//2, n) int8, kernel input
        self.s = (0.01 + 0.02 * jax.random.uniform(
            ks, (self.k // groupsize, self.n))).astype(jnp.float16)
        self.z = (0.05 * jax.random.normal(
            kz, (self.k // groupsize, self.n))).astype(jnp.float16)

    def __call__(self, A):
        A2d = A.reshape((-1, A.shape[-1]))
        C2d = marlin_3bit_with_zero_matmul(A2d, self.q_packed, self.s, self.z)
        return C2d.reshape(A.shape[:-1] + (self.n,))


if __name__ == "__main__":
    # Small shapes consistent with the module constraints (k % 256 == 0, n % 256 == 0).
    infeatures, outfeatures = 256, 256
    batch, seq = 2, 4

    layer = Layer3bitWithZero(infeatures, outfeatures, key=jax.random.PRNGKey(0))

    A = jax.random.normal(jax.random.PRNGKey(1),
                          (batch, seq, infeatures)).astype(jnp.float16)

    C = layer(A)
    C = jax.block_until_ready(C)
    assert C.shape == (batch, seq, outfeatures) and C.dtype == jnp.float16

    # Pure-JAX reference of the dequantized matmul (uses the UNPACKED codes, so it
    # also validates the nibble pack/unpack round trip). A is pre-cast to bf16 to
    # match the kernel's MXU input; dequant in f32. Tolerance accounts for the
    # kernel's bf16 dequant arithmetic / bf16 output tile.
    s_full = jnp.repeat(layer.s.astype(jnp.float32), GROUPSIZE, axis=0)
    z_full = jnp.repeat(layer.z.astype(jnp.float32), GROUPSIZE, axis=0)
    w_deq = layer.q_codes.astype(jnp.float32) * s_full + z_full
    a_ref = A.reshape(-1, infeatures).astype(jnp.bfloat16).astype(jnp.float32)
    ref = jnp.dot(a_ref, w_deq, precision="highest").reshape(batch, seq, outfeatures)
    assert jnp.allclose(C.astype(jnp.float32), ref, rtol=2e-2, atol=3e-2)

    print("KERNEL_OK")
</pallas_src>

<mosaic_0001>
module attributes {stable_mosaic.version = 11 : i64} {
  func.func @kernel(%arg0: i32, %arg1: i32, %arg2: i32, %arg3: memref<16x256xbf16, #tpu.memory_space<vmem>>, %arg4: memref<128x128xi8, #tpu.memory_space<vmem>>, %arg5: memref<4x128xbf16, #tpu.memory_space<vmem>>, %arg6: memref<8x128xbf16, #tpu.memory_space<vmem>>, %arg7: memref<256x8xbf16, #tpu.memory_space<vmem>>, %arg8: memref<16x128xbf16, #tpu.memory_space<vmem>>, %arg9: memref<16x128xf32, #tpu.memory_space<vmem>>) attributes {dimension_semantics = [#tpu.dimension_semantics<parallel>, #tpu.dimension_semantics<parallel>, #tpu.dimension_semantics<arbitrary>], iteration_bounds = array<i64: 1, 2, 1>, scalar_prefetch = 0 : i64, scratch_operands = 1 : i64, tpu.core_type = #tpu.core_type<tc>, window_params = [{transform_indices = @transform_0, window_bounds = array<i64: 16, 256>}, {transform_indices = @transform_1, window_bounds = array<i64: 128, 128>}, {transform_indices = @transform_2, window_bounds = array<i64: 4, 128>}, {transform_indices = @transform_3, window_bounds = array<i64: 8, 128>}, {pipeline_mode = #tpu.pipeline_mode<synchronous>, transform_indices = @transform_4, window_bounds = array<i64: 256, 8>}, {transform_indices = @transform_5, window_bounds = array<i64: 16, 128>}]} {
    %c0_i32 = arith.constant 0 : i32
    %0 = arith.cmpi eq, %arg2, %c0_i32 : i32
    %1 = arith.extui %0 : i1 to i32
    %c0_i32_0 = arith.constant 0 : i32
    %2 = arith.cmpi ne, %1, %c0_i32_0 : i32
    scf.if %2 {
      %cst_23 = arith.constant 0.000000e+00 : f32
      %48 = vector.broadcast %cst_23 : f32 to vector<16x128xf32>
      %c0_24 = arith.constant 0 : index
      %c0_25 = arith.constant 0 : index
      %49 = vector.load %arg9[%c0_24, %c0_25] : memref<16x128xf32, #tpu.memory_space<vmem>>, vector<16x128xf32>
      tpu.vector_store %arg9[%c0_24, %c0_25], %48 {strides = array<i32>} : memref<16x128xf32, #tpu.memory_space<vmem>>, vector<16x128xf32>,
    } else {
    }
    %c0 = arith.constant 0 : index
    %c0_1 = arith.constant 0 : index
    %3 = vector.load %arg3[%c0, %c0_1] : memref<16x256xbf16, #tpu.memory_space<vmem>>, vector<16x256xbf16>
    %c0_2 = arith.constant 0 : index
    %c0_3 = arith.constant 0 : index
    %4 = vector.load %arg7[%c0_2, %c0_3] : memref<256x8xbf16, #tpu.memory_space<vmem>>, vector<256x8xbf16>
    %cst = arith.constant dense<0.000000e+00> : vector<16x8xf32>
    %5 = tpu.matmul %3, %4, %cst {dimension_numbers = #tpu.dot_dimension_numbers<[1], [0], [0], [1], [0, 0, 1, 1], [], []>} : vector<16x256xbf16>, vector<256x8xbf16>, vector<16x8xf32> -> vector<16x8xf32>
    %c0_4 = arith.constant 0 : index
    %c0_5 = arith.constant 0 : index
    %6 = vector.load %arg9[%c0_4, %c0_5] : memref<16x128xf32, #tpu.memory_space<vmem>>, vector<16x128xf32>
    %7 = arith.truncf %5 : vector<16x8xf32> to vector<16x8xbf16>
    %c0_6 = arith.constant 0 : index
    %c0_7 = arith.constant 0 : index
    %8 = vector.load %arg6[%c0_6, %c0_7] : memref<8x128xbf16, #tpu.memory_space<vmem>>, vector<8x128xbf16>
    %cst_8 = arith.constant dense<0.000000e+00> : vector<16x128xf32>
    %9 = tpu.matmul %7, %8, %cst_8 {dimension_numbers = #tpu.dot_dimension_numbers<[1], [0], [0], [1], [0, 0, 1, 1], [], []>} : vector<16x8xbf16>, vector<8x128xbf16>, vector<16x128xf32> -> vector<16x128xf32>
    %10 = arith.addf %6, %9 : vector<16x128xf32>
    %c0_9 = arith.constant 0 : index
    %c0_10 = arith.constant 0 : index
    %11 = vector.load %arg9[%c0_9, %c0_10] : memref<16x128xf32, #tpu.memory_space<vmem>>, vector<16x128xf32>
    tpu.vector_store %arg9[%c0_9, %c0_10], %10 {strides = array<i32>} : memref<16x128xf32, #tpu.memory_space<vmem>>, vector<16x128xf32>,
    %c0_i32_11 = arith.constant 0 : i32
    %c128_i32 = arith.constant 128 : i32
    %12 = arith.muli %c0_i32_11, %c128_i32 : i32
    %13 = tpu.assume_multiple %12, 128 : i32
    %c256_i32 = arith.constant 256 : i32
    %14 = arith.muli %c0_i32_11, %c256_i32 : i32
    %15 = tpu.assume_multiple %14, 256 : i32
    %c4_i32 = arith.constant 4 : i32
    %16 = arith.muli %c0_i32_11, %c4_i32 : i32
    %17 = tpu.assume_multiple %16, 4 : i32
    %18 = arith.index_cast %13 : i32 to index
    %c0_12 = arith.constant 0 : index
    %19 = vector.load %arg4[%18, %c0_12] : memref<128x128xi8, #tpu.memory_space<vmem>>, vector<128x128xi8>
    %20 = arith.extsi %19 : vector<128x128xi8> to vector<128x128xi32>
    %21 = vector.shape_cast %20 : vector<128x128xi32> to vector<4x32x128xi32>
    %22 = arith.index_cast %17 : i32 to index
    %c0_13 = arith.constant 0 : index
    %23 = vector.load %arg5[%22, %c0_13] : memref<4x128xbf16, #tpu.memory_space<vmem>>, vector<4x128xbf16>
    %24 = vector.shape_cast %23 : vector<4x128xbf16> to vector<4x1x128xbf16>
    %cst_14 = arith.constant 6.250000e-02 : bf16
    %25 = vector.broadcast %cst_14 : bf16 to vector<4x1x128xbf16>
    %26 = arith.mulf %24, %25 : vector<4x1x128xbf16>
    %c7_i32 = arith.constant 7 : i32
    %27 = vector.broadcast %c7_i32 : i32 to vector<4x32x128xi32>
    %28 = arith.andi %21, %27 : vector<4x32x128xi32>
    %29 = arith.sitofp %28 : vector<4x32x128xi32> to vector<4x32x128xbf16>
    %30 = vector.broadcast %24 : vector<4x1x128xbf16> to vector<4x32x128xbf16>
    %31 = arith.mulf %29, %30 : vector<4x32x128xbf16>
    %c112_i32 = arith.constant 112 : i32
    %32 = vector.broadcast %c112_i32 : i32 to vector<4x32x128xi32>
    %33 = arith.andi %21, %32 : vector<4x32x128xi32>
    %34 = arith.sitofp %33 : vector<4x32x128xi32> to vector<4x32x128xbf16>
    %35 = vector.broadcast %26 : vector<4x1x128xbf16> to vector<4x32x128xbf16>
    %36 = arith.mulf %34, %35 : vector<4x32x128xbf16>
    %37 = tpu.concatenate %31, %36 in 1 : vector<4x32x128xbf16>, vector<4x32x128xbf16> -> vector<4x64x128xbf16>
    %38 = vector.shape_cast %37 : vector<4x64x128xbf16> to vector<256x128xbf16>
    %c0_15 = arith.constant 0 : index
    %39 = arith.index_cast %15 : i32 to index
    %40 = vector.load %arg3[%c0_15, %39] : memref<16x256xbf16, #tpu.memory_space<vmem>>, vector<16x256xbf16>
    %c0_16 = arith.constant 0 : index
    %c0_17 = arith.constant 0 : index
    %41 = vector.load %arg9[%c0_16, %c0_17] : memref<16x128xf32, #tpu.memory_space<vmem>>, vector<16x128xf32>
    %cst_18 = arith.constant dense<0.000000e+00> : vector<16x128xf32>
    %42 = tpu.matmul %40, %38, %cst_18 {dimension_numbers = #tpu.dot_dimension_numbers<[1], [0], [0], [1], [0, 0, 1, 1], [], []>} : vector<16x256xbf16>, vector<256x128xbf16>, vector<16x128xf32> -> vector<16x128xf32>
    %43 = arith.addf %41, %42 : vector<16x128xf32>
    %c0_19 = arith.constant 0 : index
    %c0_20 = arith.constant 0 : index
    %44 = vector.load %arg9[%c0_19, %c0_20] : memref<16x128xf32, #tpu.memory_space<vmem>>, vector<16x128xf32>
    tpu.vector_store %arg9[%c0_19, %c0_20], %43 {strides = array<i32>} : memref<16x128xf32, #tpu.memory_space<vmem>>, vector<16x128xf32>,
    %c1_i32 = arith.constant 1 : i32
    %c0_i32_21 = arith.constant 0 : i32
    %45 = arith.cmpi eq, %arg2, %c0_i32_21 : i32
    %46 = arith.extui %45 : i1 to i32
    %c0_i32_22 = arith.constant 0 : i32
    %47 = arith.cmpi ne, %46, %c0_i32_22 : i32
    scf.if %47 {
      %c0_23 = arith.constant 0 : index
      %c0_24 = arith.constant 0 : index
      %48 = vector.load %arg9[%c0_23, %c0_24] : memref<16x128xf32, #tpu.memory_space<vmem>>, vector<16x128xf32>
      %49 = arith.truncf %48 : vector<16x128xf32> to vector<16x128xbf16>
      %c0_25 = arith.constant 0 : index
      %c0_26 = arith.constant 0 : index
      %50 = vector.load %arg8[%c0_25, %c0_26] : memref<16x128xbf16, #tpu.memory_space<vmem>>, vector<16x128xbf16>
      tpu.vector_store %arg8[%c0_25, %c0_26], %49 {strides = array<i32>} : memref<16x128xbf16, #tpu.memory_space<vmem>>, vector<16x128xbf16>,
    } else {
    }
    return
  }
  func.func @transform_0(%arg0: i32, %arg1: i32, %arg2: i32) -> (i32, i32) {
    %c0_i32 = arith.constant 0 : i32
    return %arg0, %arg2 : i32, i32
  }
  func.func @transform_1(%arg0: i32, %arg1: i32, %arg2: i32) -> (i32, i32) {
    %c0_i32 = arith.constant 0 : i32
    return %arg2, %arg1 : i32, i32
  }
  func.func @transform_2(%arg0: i32, %arg1: i32, %arg2: i32) -> (i32, i32) {
    %c0_i32 = arith.constant 0 : i32
    return %arg2, %arg1 : i32, i32
  }
  func.func @transform_3(%arg0: i32, %arg1: i32, %arg2: i32) -> (i32, i32) {
    %c0_i32 = arith.constant 0 : i32
    return %arg2, %arg1 : i32, i32
  }
  func.func @transform_4(%arg0: i32, %arg1: i32, %arg2: i32) -> (i32, i32) {
    %c0_i32 = arith.constant 0 : i32
    %c0_i32_0 = arith.constant 0 : i32
    %c0_i32_1 = arith.constant 0 : i32
    return %c0_i32, %c0_i32_0 : i32, i32
  }
  func.func @transform_5(%arg0: i32, %arg1: i32, %arg2: i32) -> (i32, i32) {
    %c0_i32 = arith.constant 0 : i32
    return %arg0, %arg1 : i32, i32
  }
}

</mosaic_0001>

<llo_original>
// kernel: tpu_custom_call.1
$region0: #{tpu_custom_call.1}
  #allocation0 [shape = 'u32[]', space=smem, size = 0x4, offset = 0x4, fixed_abs, tag = 'smem constant byte address 0x4 - core index']
  #allocation1 [shape = 'u32[144,128]{1,0:T(1,128)}', space=vmem, size = 0x12000, scoped, tag = 'internal scratch']
  #allocation2 [shape = 'f32[16,128]{1,0:T(8,128)}', space=vmem, size = 0x2000, scoped, tag = 'scratch operand']
  %s0 = inlined_call_operand.vmem [shape: bf16[16,256], index: 0, kind: input, shape index: {}]
  %s1 = inlined_call_operand.vmem [shape: s8[128,256], index: 1, kind: input, shape index: {}]
  %s2 = inlined_call_operand.vmem [shape: bf16[4,256], index: 2, kind: input, shape index: {}]
  %s3 = inlined_call_operand.vmem [shape: bf16[8,256], index: 3, kind: input, shape index: {}]
  %s4 = inlined_call_operand.vmem [shape: bf16[256,8], index: 4, kind: input, shape index: {}]
  %s5 = inlined_call_operand.hbm [shape: bf16[16,256], index: 5, kind: output, shape index: {}]
  %s6 = sld [smem:[#allocation0]]
  $region99: #{tpu_custom_call.1} parent=0
    _
  %s8 = ssub.s32 1, %s6
  %s9 = scalar_select 0, %s8, %s6
  $region1: #{tpu_custom_call.1} parent=0
    #allocation3 [shape = 'u8[32768]{0}', space=vmem, size = 0x8000, scoped, tag = 'input window, operand 1']
    #allocation4 [shape = 'u8[8192]{0}', space=vmem, size = 0x2000, scoped, tag = 'output window, operand 0']
    #allocation5 [shape = 's32[2]{0}', space=sflag, size = 0x8, scoped, tag = 'scoped memory for tpu_custom_call.1']
    %10 = vsyncpa [#allocation5], 0
    %s11 = scalar_lea.sflag [#allocation5], 1
    %12 = vsyncpa %s11, 0
    loop: start=0, step=1, limit=4
    $region2: #{tpu_custom_call.1} parent=1 // loop_pre_header
      _
    $region3: #{tpu_custom_call.1} parent=1 // loop_header
      %s14 = sphi 0, %s18
      %p15 = scmp.ge.s32.totalorder %s14, 4
      %s21 = sphi 0, %s40
      %s22 = sphi 0, %s36
      %s23 = sphi 0, %s32
      %s24 = sphi 0, %s21
      %s25 = sphi 0, %s22
      %s26 = sphi 0, %s23
      %s27 = sphi 0, %s24
      %s28 = sphi 0, %s25
      %s29 = sphi 0, %s26
      %s45 = sphi 0, %s47
      %s48 = sphi 0, %s45
      %s49 = sphi 0, %s48
      %s65 = sphi 0, %s49
      %s73 = sphi 0, %s75
      %s76 = sphi 0, %s73
      %s77 = sphi 0, %s76
      %s93 = sphi 0, %s77
      %s101 = sphi 0, %s103
      %s104 = sphi 0, %s101
      %s105 = sphi 0, %s104
      %s121 = sphi 0, %s105
      %s129 = sphi 0, %s131
      %s132 = sphi 0, %s129
      %s133 = sphi 0, %s132
      %s149 = sphi 0, %s133
      %s153 = sphi 0, %s153
      %s155 = sphi 0, %s153
      %s156 = sphi 0, %s155
      %s170 = sphi 0, %s156
      %s178 = sphi 0, %s180
      %s181 = sphi 0, %s178
      %s182 = sphi 0, %s181
      %s198 = sphi 0, %s182
    $region4: #{tpu_custom_call.1} parent=1 // loop_header_branch
      %17 = sbr.rel (%p15) target = $region8
    $region5: #{tpu_custom_call.1} parent=1 // loop_body
      %s19 = ssub.s32 %s14, 1
      %s20 = ssub.s32 %s14, 2
      %s30 = sadd.s32 1, %s23
      %p31 = scmp.ge.s32.totalorder %s30, 1
      %s32 = scalar_select %p31, 0, %s30
      %s33 = sadd.s32 1, %s22
      %s34 = scalar_select %p31, %s33, %s22
      %p35 = scmp.ge.s32.totalorder %s34, 2
      %s36 = scalar_select %p35, 0, %s34
      %s37 = sadd.s32 1, %s21
      %s38 = scalar_select %p35, %s37, %s21
      %p39 = scmp.ge.s32.totalorder %s38, 1
      %s40 = scalar_select %p39, 0, %s38
      %s41 = ssub.s32 %s21, %s40
      %s42 = ssub.s32 %s23, %s32
      %s43 = sor.u32 %s41, %s42
      %p44 = scmp.eq.s32.totalorder %s43, 0
      %s46 = sadd.s32 %s45, 1
      %s47 = scalar_select %p44, %s45, %s46
      %p50 = pneg %p44
      %p51 = scmp.eq.s32.totalorder %s14, 1
      %p52 = por %p50, %p51
      %p53 = scmp.ne.s32.totalorder %s45, %s48
      %p54 = scmp.eq.s32.totalorder %s14, 0
      %p55 = por %p53, %p54
      %p56 = scmp.ne.s32.totalorder %s45, %s48
      %p57 = scmp.eq.s32.totalorder %s19, 1
      %p58 = por %p56, %p57
      %p59 = scmp.ne.s32.totalorder %s48, %s49
      %p60 = scmp.eq.s32.totalorder %s19, 0
      %p61 = por %p59, %p60
      %p62 = scmp.ne.s32.totalorder %s48, %s49
      %p63 = scmp.eq.s32.totalorder %s20, 1
      %p64 = por %p62, %p63
      %p66 = scmp.ne.s32.totalorder %s49, %s65
      %p67 = scmp.eq.s32.totalorder %s20, 0
      %p68 = por %p66, %p67
      %s69 = ssub.s32 %s23, %s32
      %s70 = ssub.s32 %s22, %s36
      %s71 = sor.u32 %s69, %s70
      %p72 = scmp.eq.s32.totalorder %s71, 0
      %s74 = sadd.s32 %s73, 1
      %s75 = scalar_select %p72, %s73, %s74
      %p78 = pneg %p72
      %p79 = scmp.eq.s32.totalorder %s14, 1
      %p80 = por %p78, %p79
      %p81 = scmp.ne.s32.totalorder %s73, %s76
      %p82 = scmp.eq.s32.totalorder %s14, 0
      %p83 = por %p81, %p82
      %p84 = scmp.ne.s32.totalorder %s73, %s76
      %p85 = scmp.eq.s32.totalorder %s19, 1
      %p86 = por %p84, %p85
      %p87 = scmp.ne.s32.totalorder %s76, %s77
      %p88 = scmp.eq.s32.totalorder %s19, 0
      %p89 = por %p87, %p88
      %p90 = scmp.ne.s32.totalorder %s76, %s77
      %p91 = scmp.eq.s32.totalorder %s20, 1
      %p92 = por %p90, %p91
      %p94 = scmp.ne.s32.totalorder %s77, %s93
      %p95 = scmp.eq.s32.totalorder %s20, 0
      %p96 = por %p94, %p95
      %s97 = ssub.s32 %s23, %s32
      %s98 = ssub.s32 %s22, %s36
      %s99 = sor.u32 %s97, %s98
      %p100 = scmp.eq.s32.totalorder %s99, 0
      %s102 = sadd.s32 %s101, 1
      %s103 = scalar_select %p100, %s101, %s102
      %p106 = pneg %p100
      %p107 = scmp.eq.s32.totalorder %s14, 1
      %p108 = por %p106, %p107
      %p109 = scmp.ne.s32.totalorder %s101, %s104
      %p110 = scmp.eq.s32.totalorder %s14, 0
      %p111 = por %p109, %p110
      %p112 = scmp.ne.s32.totalorder %s101, %s104
      %p113 = scmp.eq.s32.totalorder %s19, 1
      %p114 = por %p112, %p113
      %p115 = scmp.ne.s32.totalorder %s104, %s105
      %p116 = scmp.eq.s32.totalorder %s19, 0
      %p117 = por %p115, %p116
      %p118 = scmp.ne.s32.totalorder %s104, %s105
      %p119 = scmp.eq.s32.totalorder %s20, 1
      %p120 = por %p118, %p119
      %p122 = scmp.ne.s32.totalorder %s105, %s121
      %p123 = scmp.eq.s32.totalorder %s20, 0
      %p124 = por %p122, %p123
      %s125 = ssub.s32 %s23, %s32
      %s126 = ssub.s32 %s22, %s36
      %s127 = sor.u32 %s125, %s126
      %p128 = scmp.eq.s32.totalorder %s127, 0
      %s130 = sadd.s32 %s129, 1
      %s131 = scalar_select %p128, %s129, %s130
      %p134 = pneg %p128
      %p135 = scmp.eq.s32.totalorder %s14, 1
      %p136 = por %p134, %p135
      %p137 = scmp.ne.s32.totalorder %s129, %s132
      %p138 = scmp.eq.s32.totalorder %s14, 0
      %p139 = por %p137, %p138
      %p140 = scmp.ne.s32.totalorder %s129, %s132
      %p141 = scmp.eq.s32.totalorder %s19, 1
      %p142 = por %p140, %p141
      %p143 = scmp.ne.s32.totalorder %s132, %s133
      %p144 = scmp.eq.s32.totalorder %s19, 0
      %p145 = por %p143, %p144
      %p146 = scmp.ne.s32.totalorder %s132, %s133
      %p147 = scmp.eq.s32.totalorder %s20, 1
      %p148 = por %p146, %p147
      %p150 = scmp.ne.s32.totalorder %s133, %s149
      %p151 = scmp.eq.s32.totalorder %s20, 0
      %p152 = por %p150, %p151
      %s154 = sadd.s32 %s153, 1
      %p157 = scmp.eq.s32.totalorder %s14, 1
      %p158 = scmp.ne.s32.totalorder %s153, %s155
      %p159 = scmp.eq.s32.totalorder %s14, 0
      %p160 = por %p158, %p159
      %p161 = scmp.ne.s32.totalorder %s153, %s155
      %p162 = scmp.eq.s32.totalorder %s19, 1
      %p163 = por %p161, %p162
      %p164 = scmp.ne.s32.totalorder %s155, %s156
      %p165 = scmp.eq.s32.totalorder %s19, 0
      %p166 = por %p164, %p165
      %p167 = scmp.ne.s32.totalorder %s155, %s156
      %p168 = scmp.eq.s32.totalorder %s20, 1
      %p169 = por %p167, %p168
      %p171 = scmp.ne.s32.totalorder %s156, %s170
      %p172 = scmp.eq.s32.totalorder %s20, 0
      %p173 = por %p171, %p172
      %s174 = ssub.s32 %s21, %s40
      %s175 = ssub.s32 %s22, %s36
      %s176 = sor.u32 %s174, %s175
      %p177 = scmp.eq.s32.totalorder %s176, 0
      %s179 = sadd.s32 %s178, 1
      %s180 = scalar_select %p177, %s178, %s179
      %p183 = pneg %p177
      %p184 = scmp.eq.s32.totalorder %s14, 1
      %p185 = por %p183, %p184
      %p186 = scmp.ne.s32.totalorder %s178, %s181
      %p187 = scmp.eq.s32.totalorder %s14, 0
      %p188 = por %p186, %p187
      %p189 = scmp.ne.s32.totalorder %s178, %s181
      %p190 = scmp.eq.s32.totalorder %s19, 1
      %p191 = por %p189, %p190
      %p192 = scmp.ne.s32.totalorder %s181, %s182
      %p193 = scmp.eq.s32.totalorder %s19, 0
      %p194 = por %p192, %p193
      %p195 = scmp.ne.s32.totalorder %s181, %s182
      %p196 = scmp.eq.s32.totalorder %s20, 1
      %p197 = por %p195, %p196
      %p199 = scmp.ne.s32.totalorder %s182, %s198
      %p200 = scmp.eq.s32.totalorder %s20, 0
      %p201 = por %p199, %p200
      %p202 = scmp.le.s32.totalorder 1, %s14
      %p203 = scmp.lt.s32.totalorder %s14, 3
      %p204 = pnand %p202, %p203
      %p205 = pneg %p204
      // Predicated region
      $region9: #{tpu_custom_call.1} parent=5 // pred_check
        _
      $region10: #{tpu_custom_call.1} parent=5 // pred_check_branch
        %207 = sbr.rel (%p204) target = $region12
      $region11: #{tpu_custom_call.1} parent=5 // pred_region
        %s208 = ssub.s32 %s14, 1
        // Predicated region
        $region13: #{tpu_custom_call.1} parent=11 // pred_check
          %p209 = pneg %p61
        $region14: #{tpu_custom_call.1} parent=11 // pred_check_branch
          %211 = sbr.rel (%p209) target = $region16
        $region15: #{tpu_custom_call.1} parent=11 // pred_region
          %s212 = smul.u32 2, %s24
          %s213 = smul.u32 2, %s26
          %p214 = scmp.lt.s32.totalorder %s212, 1
          %s215 = scalar_select %p214, %s212, 1
          %p216 = scmp.lt.s32.totalorder %s213, 1
          %s217 = scalar_select %p216, %s213, 1
          %s218 = smul.addr %s215, 2
          %s219 = sadd.s32 %s217, %s218
          %s220 = smul.addr %s219, 4
          %s221 = scalar_lea.vmem %s0, %s220
          %s222 = smul.u32 2, %s24
          %s223 = smul.u32 2, %s26
        $region16: #{tpu_custom_call.1} parent=11 // pred_fallthru
          _
        // Predicated region
        $region17: #{tpu_custom_call.1} parent=11 // pred_check
          %p224 = pneg %p166
        $region18: #{tpu_custom_call.1} parent=11 // pred_check_branch
          %226 = sbr.rel (%p224) target = $region20
        $region19: #{tpu_custom_call.1} parent=11 // pred_region
          _
        $region20: #{tpu_custom_call.1} parent=11 // pred_fallthru
          _
      $region12: #{tpu_custom_call.1} parent=5 // pred_fallthru
        _
      %p227 = scmp.lt.s32.totalorder %s14, 2
      // Predicated region
      $region21: #{tpu_custom_call.1} parent=5 // pred_check
        %p228 = pneg %p227
      $region22: #{tpu_custom_call.1} parent=5 // pred_check_branch
        %230 = sbr.rel (%p228) target = $region24
      $region23: #{tpu_custom_call.1} parent=5 // pred_region
        // Predicated region
        $region25: #{tpu_custom_call.1} parent=23 // pred_check
          %p231 = pneg %p83
        $region26: #{tpu_custom_call.1} parent=23 // pred_check_branch
          %233 = sbr.rel (%p231) target = $region28
        $region27: #{tpu_custom_call.1} parent=23 // pred_region
          %s234 = sand.u32 %s73, 1
          %s235 = sand.u32 %s73, 1
          %s236 = smul.addr %s235, 32
          %s237 = scalar_lea.vmem [#allocation3], %s236
          %s238 = smul.u32 4, %s23
          %s239 = smul.addr %s238, 2
          %s240 = sadd.s32 %s22, %s239
          %s241 = smul.addr %s240, 8
          %s242 = scalar_lea.vmem %s1, %s241
          // Predicated region
          $region29: #{tpu_custom_call.1} parent=27 // pred_check
            _
          $region30: #{tpu_custom_call.1} parent=27 // pred_check_branch
            %244 = sbr.rel (0) target = $region32
          $region31: #{tpu_custom_call.1} parent=27 // pred_region
            // Predicated region
            $region33: #{tpu_custom_call.1} parent=31 // pred_check
              _
            $region34: #{tpu_custom_call.1} parent=31 // pred_check_branch
              %246 = sbr.rel (0) target = $region36
            $region35: #{tpu_custom_call.1} parent=31 // pred_region
              // Predicated region
              $region48: #{tpu_custom_call.1} parent=35 // pred_check
                _
              $region49: #{tpu_custom_call.1} parent=35 // pred_check_branch
                %267 = sbr.rel (0) target = $region51
              $region50: #{tpu_custom_call.1} parent=35 // pred_region
                loop: start=0, step=1, limit=1
                $region52: #{tpu_custom_call.1} parent=50 // loop_pre_header
                  _
                $region53: #{tpu_custom_call.1} parent=50 // loop_header
                  %s269 = sphi 0, %s273
                  %p270 = scmp.ge.s32.totalorder %s269, 1
                  %s274 = sphi %s242, %s242
                  %s275 = sphi %s237, %s237
                $region54: #{tpu_custom_call.1} parent=50 // loop_header_branch
                  %272 = sbr.rel (%p270) target = $region58
                $region55: #{tpu_custom_call.1} parent=50 // loop_body
                  %v276 = vld [vmem:[%s274] sm:$0xff]
                  %277 = vst [vmem:[%s275] sm:$0xff] %v276
                  %v278 = vld [vmem:[%s274 + $0x10] sm:$0xff]
                  %279 = vst [vmem:[%s275 + $0x8] sm:$0xff] %v278
                  %v280 = vld [vmem:[%s274 + $0x20] sm:$0xff]
                  %281 = vst [vmem:[%s275 + $0x10] sm:$0xff] %v280
                  %v282 = vld [vmem:[%s274 + $0x30] sm:$0xff]
                  %283 = vst [vmem:[%s275 + $0x18] sm:$0xff] %v282
                $region56: #{tpu_custom_call.1} parent=50 // loop_footer
                  %s273 = sadd.s32 1, %s269
                $region57: #{tpu_custom_call.1} parent=50 // loop_footer_branch
                  %268 = sbr.rel target = $region53
                $region58: #{tpu_custom_call.1} parent=50 // loop_exit
                  _
              $region51: #{tpu_custom_call.1} parent=35 // pred_fallthru
                _
              // Predicated region
              $region59: #{tpu_custom_call.1} parent=35 // pred_check
                _
              $region60: #{tpu_custom_call.1} parent=35 // pred_check_branch
                %285 = sbr.rel target = $region62
              $region61: #{tpu_custom_call.1} parent=35 // pred_region
                _
              $region62: #{tpu_custom_call.1} parent=35 // pred_fallthru
                _
            $region36: #{tpu_custom_call.1} parent=31 // pred_fallthru
              _
            // Predicated region
            $region37: #{tpu_custom_call.1} parent=31 // pred_check
              _
            $region38: #{tpu_custom_call.1} parent=31 // pred_check_branch
              %248 = sbr.rel target = $region40
            $region39: #{tpu_custom_call.1} parent=31 // pred_region
              loop: start=0, step=1, limit=1
              $region41: #{tpu_custom_call.1} parent=39 // loop_pre_header
                _
              $region42: #{tpu_custom_call.1} parent=39 // loop_header
                %s251 = sphi 0, %s255
                %p252 = scmp.ge.s32.totalorder %s251, 1
                %s256 = sphi %s242, %s242
                %s257 = sphi %s237, %s237
              $region43: #{tpu_custom_call.1} parent=39 // loop_header_branch
                %254 = sbr.rel (%p252) target = $region47
              $region44: #{tpu_custom_call.1} parent=39 // loop_body
                %v258 = vld [vmem:[%s256] sm:$0xff]
                %259 = vst [vmem:[%s257] sm:$0xff] %v258
                %v260 = vld [vmem:[%s256 + $0x10] sm:$0xff]
                %261 = vst [vmem:[%s257 + $0x8] sm:$0xff] %v260
                %v262 = vld [vmem:[%s256 + $0x20] sm:$0xff]
                %263 = vst [vmem:[%s257 + $0x10] sm:$0xff] %v262
                %v264 = vld [vmem:[%s256 + $0x30] sm:$0xff]
                %265 = vst [vmem:[%s257 + $0x18] sm:$0xff] %v264
              $region45: #{tpu_custom_call.1} parent=39 // loop_footer
                %s255 = sadd.s32 1, %s251
              $region46: #{tpu_custom_call.1} parent=39 // loop_footer_branch
                %250 = sbr.rel target = $region42
              $region47: #{tpu_custom_call.1} parent=39 // loop_exit
                _
            $region40: #{tpu_custom_call.1} parent=31 // pred_fallthru
              _
          $region32: #{tpu_custom_call.1} parent=27 // pred_fallthru
            _
          %286 = vnop
        $region28: #{tpu_custom_call.1} parent=23 // pred_fallthru
          _
        // Predicated region
        $region63: #{tpu_custom_call.1} parent=23 // pred_check
          %p287 = pneg %p111
        $region64: #{tpu_custom_call.1} parent=23 // pred_check_branch
          %289 = sbr.rel (%p287) target = $region66
        $region65: #{tpu_custom_call.1} parent=23 // pred_region
          %p290 = scmp.lt.s32.totalorder %s23, 0
          %s291 = scalar_select %p290, %s23, 0
          %p292 = scmp.lt.s32.totalorder %s22, 1
          %s293 = scalar_select %p292, %s22, 1
          %s294 = smul.addr %s291, 2
          %s295 = sadd.s32 %s293, %s294
          %s296 = smul.addr %s295, 2
          %s297 = scalar_lea.vmem %s2, %s296
        $region66: #{tpu_custom_call.1} parent=23 // pred_fallthru
          _
        // Predicated region
        $region67: #{tpu_custom_call.1} parent=23 // pred_check
          %p298 = pneg %p139
        $region68: #{tpu_custom_call.1} parent=23 // pred_check_branch
          %300 = sbr.rel (%p298) target = $region70
        $region69: #{tpu_custom_call.1} parent=23 // pred_region
          %p301 = scmp.lt.s32.totalorder %s23, 0
          %s302 = scalar_select %p301, %s23, 0
          %p303 = scmp.lt.s32.totalorder %s22, 1
          %s304 = scalar_select %p303, %s22, 1
          %s305 = smul.addr %s302, 2
          %s306 = sadd.s32 %s304, %s305
          %s307 = smul.addr %s306, 4
          %s308 = scalar_lea.vmem %s3, %s307
        $region70: #{tpu_custom_call.1} parent=23 // pred_fallthru
          _
      $region24: #{tpu_custom_call.1} parent=5 // pred_fallthru
        _
      %p309 = scmp.le.s32.totalorder 1, %s14
      %p310 = scmp.lt.s32.totalorder %s14, 3
      %p311 = pnand %p309, %p310
      %p312 = pneg %p311
      // Predicated region
      $region71: #{tpu_custom_call.1} parent=5 // pred_check
        _
      $region72: #{tpu_custom_call.1} parent=5 // pred_check_branch
        %314 = sbr.rel (%p311) target = $region74
      $region73: #{tpu_custom_call.1} parent=5 // pred_region
        %s315 = ssub.s32 %s14, 1
        %s316 = sand.u32 %s76, 1
        %s317 = sand.u32 %s76, 1
        %s318 = smul.addr %s317, 32
        %s319 = scalar_lea.vmem [#allocation3], %s318
        // Predicated region
        $region75: #{tpu_custom_call.1} parent=73 // pred_check
          %p320 = pneg %p89
        $region76: #{tpu_custom_call.1} parent=73 // pred_check_branch
          %322 = sbr.rel (%p320) target = $region78
        $region77: #{tpu_custom_call.1} parent=73 // pred_region
          _
        $region78: #{tpu_custom_call.1} parent=73 // pred_fallthru
          _
        %s323 = smul.u32 2, %s24
        %s324 = smul.u32 2, %s26
        %p325 = scmp.lt.s32.totalorder %s323, 1
        %s326 = scalar_select %p325, %s323, 1
        %p327 = scmp.lt.s32.totalorder %s324, 1
        %s328 = scalar_select %p327, %s324, 1
        %s329 = smul.addr %s326, 2
        %s330 = sadd.s32 %s328, %s329
        %s331 = smul.addr %s330, 4
        %s332 = scalar_lea.vmem %s0, %s331
        %p333 = pneg %p61
        %p334 = pneg %p58
        %s335 = sand.u32 %s76, 1
        %s336 = sand.u32 %s76, 1
        %s337 = smul.addr %s336, 32
        %s338 = scalar_lea.vmem [#allocation3], %s337
        %p339 = pneg %p89
        %p340 = pneg %p86
        %p341 = scmp.lt.s32.totalorder %s26, 0
        %s342 = scalar_select %p341, %s26, 0
        %p343 = scmp.lt.s32.totalorder %s25, 1
        %s344 = scalar_select %p343, %s25, 1
        %s345 = smul.addr %s342, 2
        %s346 = sadd.s32 %s344, %s345
        %s347 = smul.addr %s346, 2
        %s348 = scalar_lea.vmem %s2, %s347
        %p349 = pneg %p117
        %p350 = pneg %p114
        %p351 = scmp.lt.s32.totalorder %s26, 0
        %s352 = scalar_select %p351, %s26, 0
        %p353 = scmp.lt.s32.totalorder %s25, 1
        %s354 = scalar_select %p353, %s25, 1
        %s355 = smul.addr %s352, 2
        %s356 = sadd.s32 %s354, %s355
        %s357 = smul.addr %s356, 4
        %s358 = scalar_lea.vmem %s3, %s357
        %p359 = pneg %p145
        %p360 = pneg %p142
        %p361 = pneg %p166
        %p362 = pneg %p163
        %p363 = pneg %p194
        %p364 = pneg %p191
        %s365 = sand.u32 %s181, 1
        %s366 = scalar_lea.sflag [#allocation5], %s365
        %s367 = sand.u32 %s181, 1
        %s368 = smul.addr %s367, 8
        %s369 = scalar_lea.vmem [#allocation4], %s368
        %s370 = smul.u32 2, %s24
        %s371 = smul.u32 2, %s26
        %p372 = scmp.lt.s32.totalorder %s370, 1
        %s373 = scalar_select %p372, %s370, 1
        %p374 = scmp.lt.s32.totalorder %s371, 1
        %s375 = scalar_select %p374, %s371, 1
        %s376 = smul.addr %s373, 2
        %s377 = sadd.s32 %s375, %s376
        %s378 = smul.addr %s377, 4
        %s379 = scalar_lea.vmem %s0, %s378
        %s380 = smul.u32 2, %s24
        %s381 = smul.u32 2, %s26
        %s382 = smul.u32 4, %s26
        %p383 = scmp.lt.s32.totalorder %s26, 0
        %s384 = scalar_select %p383, %s26, 0
        %p385 = scmp.lt.s32.totalorder %s25, 1
        %s386 = scalar_select %p385, %s25, 1
        %s387 = smul.addr %s384, 2
        %s388 = sadd.s32 %s386, %s387
        %s389 = smul.addr %s388, 2
        %s390 = scalar_lea.vmem %s2, %s389
        %p391 = scmp.lt.s32.totalorder %s26, 0
        %s392 = scalar_select %p391, %s26, 0
        %p393 = scmp.lt.s32.totalorder %s25, 1
        %s394 = scalar_select %p393, %s25, 1
        %s395 = smul.addr %s392, 2
        %s396 = sadd.s32 %s394, %s395
        %s397 = smul.addr %s396, 4
        %s398 = scalar_lea.vmem %s3, %s397
        %s399 = smul.u32 2, %s24
        %p402 = scmp.eq.s32.totalorder %s26, 0
        // Predicated region
        $region79: #{tpu_custom_call.1} parent=73 // pred_check
          %p403 = pneg %p402
        $region80: #{tpu_custom_call.1} parent=73 // pred_check_branch
          %405 = sbr.rel (%p403) target = $region82
        $region81: #{tpu_custom_call.1} parent=73 // pred_region
          %406 = vst [vmem:[#allocation2] sm:$0xff] 0.0
          %407 = vst [vmem:[#allocation2 + $0x8] sm:$0xff] 0.0
        $region82: #{tpu_custom_call.1} parent=73 // pred_fallthru
          _
        %v408 = vld [vmem:[%s379] sm:$0xff]
        %v409 = vld [vmem:[%s379 + $0x8] sm:$0xff]
        %v410 = vld [vmem:[%s4] sm:$0xf]
        %v411 = vld [vmem:[%s4 + $0x4] sm:$0xf]
        %v412 = vld [vmem:[%s4 + $0x8] sm:$0xf]
        %v413 = vld [vmem:[%s4 + $0xc] sm:$0xf]
        %v414 = vld [vmem:[%s4 + $0x10] sm:$0xf]
        %v415 = vld [vmem:[%s4 + $0x14] sm:$0xf]
        %v416 = vld [vmem:[%s4 + $0x18] sm:$0xf]
        %v417 = vld [vmem:[%s4 + $0x1c] sm:$0xf]
        %v418 = vld [vmem:[%s4 + $0x20] sm:$0xf]
        %v419 = vld [vmem:[%s4 + $0x24] sm:$0xf]
        %v420 = vld [vmem:[%s4 + $0x28] sm:$0xf]
        %v421 = vld [vmem:[%s4 + $0x2c] sm:$0xf]
        %v422 = vld [vmem:[%s4 + $0x30] sm:$0xf]
        %v423 = vld [vmem:[%s4 + $0x34] sm:$0xf]
        %v424 = vld [vmem:[%s4 + $0x38] sm:$0xf]
        %v425 = vld [vmem:[%s4 + $0x3c] sm:$0xf]
        %v426 = vld [vmem:[%s4 + $0x40] sm:$0xf]
        %v427 = vld [vmem:[%s4 + $0x44] sm:$0xf]
        %v428 = vld [vmem:[%s4 + $0x48] sm:$0xf]
        %v429 = vld [vmem:[%s4 + $0x4c] sm:$0xf]
        %v430 = vld [vmem:[%s4 + $0x50] sm:$0xf]
        %v431 = vld [vmem:[%s4 + $0x54] sm:$0xf]
        %v432 = vld [vmem:[%s4 + $0x58] sm:$0xf]
        %v433 = vld [vmem:[%s4 + $0x5c] sm:$0xf]
        %v434 = vld [vmem:[%s4 + $0x60] sm:$0xf]
        %v435 = vld [vmem:[%s4 + $0x64] sm:$0xf]
        %v436 = vld [vmem:[%s4 + $0x68] sm:$0xf]
        %v437 = vld [vmem:[%s4 + $0x6c] sm:$0xf]
        %v438 = vld [vmem:[%s4 + $0x70] sm:$0xf]
        %v439 = vld [vmem:[%s4 + $0x74] sm:$0xf]
        %v440 = vld [vmem:[%s4 + $0x78] sm:$0xf]
        %v441 = vld [vmem:[%s4 + $0x7c] sm:$0xf]
        %v444 = vunpack.c.l.b16 %v408
        %v445 = vunpack.c.h.b16 %v408
        %v446 = vunpack.c.l.b16 %v409
        %v447 = vunpack.c.h.b16 %v409
        %v448 = vpack.c.b16 %v446, %v444
        %v449 = vpack.c.b16 %v447, %v445
        %v484 = vunpack.c.l.b16 %v410
        %v485 = vunpack.c.l.b16 %v411
        %v486 = vunpack.c.l.b16 %v412
        %v487 = vunpack.c.l.b16 %v413
        %v488 = vunpack.c.l.b16 %v414
        %v489 = vunpack.c.l.b16 %v415
        %v490 = vunpack.c.l.b16 %v416
        %v491 = vunpack.c.l.b16 %v417
        %v492 = vunpack.c.l.b16 %v418
        %v493 = vunpack.c.l.b16 %v419
        %v494 = vunpack.c.l.b16 %v420
        %v495 = vunpack.c.l.b16 %v421
        %v496 = vunpack.c.l.b16 %v422
        %v497 = vunpack.c.l.b16 %v423
        %v498 = vunpack.c.l.b16 %v424
        %v499 = vunpack.c.l.b16 %v425
        %v500 = vunpack.c.l.b16 %v426
        %v501 = vunpack.c.l.b16 %v427
        %v502 = vunpack.c.l.b16 %v428
        %v503 = vunpack.c.l.b16 %v429
        %v504 = vunpack.c.l.b16 %v430
        %v505 = vunpack.c.l.b16 %v431
        %v506 = vunpack.c.l.b16 %v432
        %v507 = vunpack.c.l.b16 %v433
        %v508 = vunpack.c.l.b16 %v434
        %v509 = vunpack.c.l.b16 %v435
        %v510 = vunpack.c.l.b16 %v436
        %v511 = vunpack.c.l.b16 %v437
        %v512 = vunpack.c.l.b16 %v438
        %v513 = vunpack.c.l.b16 %v439
        %v514 = vunpack.c.l.b16 %v440
        %v515 = vunpack.c.l.b16 %v441
        %v516 = vpack.c.b16 %v485, %v484
        %v517 = vpack.c.b16 %v487, %v486
        %v518 = vpack.c.b16 %v489, %v488
        %v519 = vpack.c.b16 %v491, %v490
        %v520 = vpack.c.b16 %v493, %v492
        %v521 = vpack.c.b16 %v495, %v494
        %v522 = vpack.c.b16 %v497, %v496
        %v523 = vpack.c.b16 %v499, %v498
        %v524 = vpack.c.b16 %v501, %v500
        %v525 = vpack.c.b16 %v503, %v502
        %v526 = vpack.c.b16 %v505, %v504
        %v527 = vpack.c.b16 %v507, %v506
        %v528 = vpack.c.b16 %v509, %v508
        %v529 = vpack.c.b16 %v511, %v510
        %v530 = vpack.c.b16 %v513, %v512
        %v531 = vpack.c.b16 %v515, %v514
        %548 = vmatprep.subr.bf16.mxu0 0
        %549 = vmatpush1.bf16.msra.mxu0 %v516
        %550 = vmatprep.subr.bf16.mxu0 0
        %551 = vmatpush1.bf16.msra.mxu0 %v517
        %552 = vmatprep.subr.bf16.mxu0 0
        %553 = vmatpush1.bf16.msra.mxu0 %v518
        %554 = vmatprep.subr.bf16.mxu0 0
        %555 = vmatpush1.bf16.msra.mxu0 %v519
        %556 = vmatprep.subr.bf16.mxu0 0
        %557 = vmatpush1.bf16.msra.mxu0 %v520
        %558 = vmatprep.subr.bf16.mxu0 0
        %559 = vmatpush1.bf16.msra.mxu0 %v521
        %560 = vmatprep.subr.bf16.mxu0 0
        %561 = vmatpush1.bf16.msra.mxu0 %v522
        %562 = vmatprep.subr.bf16.mxu0 0
        %563 = vmatpush1.bf16.msra.mxu0 %v523
        %564 = vmatprep.subr.bf16.mxu0 0
        %565 = vmatpush1.bf16.msra.mxu0 %v524
        %566 = vmatprep.subr.bf16.mxu0 0
        %567 = vmatpush1.bf16.msra.mxu0 %v525
        %568 = vmatprep.subr.bf16.mxu0 0
        %569 = vmatpush1.bf16.msra.mxu0 %v526
        %570 = vmatprep.subr.bf16.mxu0 0
        %571 = vmatpush1.bf16.msra.mxu0 %v527
        %572 = vmatprep.subr.bf16.mxu0 0
        %573 = vmatpush1.bf16.msra.mxu0 %v528
        %574 = vmatprep.subr.bf16.mxu0 0
        %575 = vmatpush1.bf16.msra.mxu0 %v529
        %576 = vmatprep.subr.bf16.mxu0 0
        %577 = vmatpush1.bf16.msra.mxu0 %v530
        %578 = vmatprep.subr.bf16.mxu0 0
        %579 = vmatpush1.bf16.msra.mxu0 %v531
        %580 = vmatprep.mubr.bf16.mxu0 %v449
        %581 = vmatmul.mubr.bf16.gmra.mrb[0].mxu0 %v448
        %v582 = vpop.f32.mrb[0].mxu0
        %v583 = vadd.f32 0.0, %v582
        %v584 = vpop.f32.mrb[0].mxu0
        %v585 = vpop.f32.mrb[0].mxu0
        %v586 = vadd.f32 0.0, %v585
        %v587 = vpop.f32.mrb[0].mxu0
        %588 = vdwg.mxu0
        %v589 = vld [vmem:[#allocation2] sm:$0xff]
        %v590 = vld [vmem:[#allocation2 + $0x8] sm:$0xff]
        %v591 = vpack.c.bf16 %v586, %v583
        %v592 = vld [vmem:[%s398] sm:$0xf]
        %vm593 = vcmask 64512
        %v595 = vsel %vm593, %v591, 0
        %vm597 = vcmask 1043456
        %v599 = vsel %vm597, %v592, 0
        %601 = vmatprep.subr.bf16.mxu0 0
        %602 = vmatpush1.bf16.msra.mxu0 %v599
        %603 = vmatprep.subr.bf16.mxu0 0
        %604 = vmatpush1.bf16.msra.mxu0 0
        %605 = vmatprep.subr.bf16.mxu0 0
        %606 = vmatpush1.bf16.msra.mxu0 0
        %607 = vmatprep.subr.bf16.mxu0 0
        %608 = vmatpush1.bf16.msra.mxu0 0
        %609 = vmatprep.subr.bf16.mxu0 0
        %610 = vmatpush1.bf16.msra.mxu0 0
        %611 = vmatprep.subr.bf16.mxu0 0
        %612 = vmatpush1.bf16.msra.mxu0 0
        %613 = vmatprep.subr.bf16.mxu0 0
        %614 = vmatpush1.bf16.msra.mxu0 0
        %615 = vmatprep.subr.bf16.mxu0 0
        %616 = vmatpush1.bf16.msra.mxu0 0
        %617 = vmatprep.subr.bf16.mxu0 0
        %618 = vmatpush1.bf16.msra.mxu0 0
        %619 = vmatprep.subr.bf16.mxu0 0
        %620 = vmatpush1.bf16.msra.mxu0 0
        %621 = vmatprep.subr.bf16.mxu0 0
        %622 = vmatpush1.bf16.msra.mxu0 0
        %623 = vmatprep.subr.bf16.mxu0 0
        %624 = vmatpush1.bf16.msra.mxu0 0
        %625 = vmatprep.subr.bf16.mxu0 0
        %626 = vmatpush1.bf16.msra.mxu0 0
        %627 = vmatprep.subr.bf16.mxu0 0
        %628 = vmatpush1.bf16.msra.mxu0 0
        %629 = vmatprep.subr.bf16.mxu0 0
        %630 = vmatpush1.bf16.msra.mxu0 0
        %631 = vmatprep.subr.bf16.mxu0 0
        %632 = vmatpush1.bf16.msra.mxu0 0
        %633 = vmatprep.mubr.bf16.mxu0 0
        %634 = vmatmul.mubr.bf16.gmra.mrb[0].mxu0 %v595
        %v635 = vpop.f32.mrb[0].mxu0
        %v636 = vadd.f32 0.0, %v635
        %v637 = vpop.f32.mrb[0].mxu0
        %v638 = vpop.f32.mrb[0].mxu0
        %v639 = vadd.f32 0.0, %v638
        %v640 = vpop.f32.mrb[0].mxu0
        %641 = vdwg.mxu0
        %v642 = vadd.f32 %v589, %v636
        %v643 = vadd.f32 %v590, %v639
        %644 = vst [vmem:[#allocation2] sm:$0xff] %v642
        %645 = vst [vmem:[#allocation2 + $0x8] sm:$0xff] %v643
        %v646 = vld [vmem:[%s319] sm:$0xff]
        %v647 = vld [vmem:[%s319 + $0x8] sm:$0xff]
        %v648 = vld [vmem:[%s319 + $0x10] sm:$0xff]
        %v649 = vld [vmem:[%s319 + $0x18] sm:$0xff]
        %v650 = vunpack.c.0.s8 %v646
        %v651 = vunpack.c.1.s8 %v646
        %v652 = vunpack.c.2.s8 %v646
        %v653 = vunpack.c.3.s8 %v646
        %v654 = vunpack.c.0.s8 %v647
        %v655 = vunpack.c.1.s8 %v647
        %v656 = vunpack.c.2.s8 %v647
        %v657 = vunpack.c.3.s8 %v647
        %v658 = vunpack.c.0.s8 %v648
        %v659 = vunpack.c.1.s8 %v648
        %v660 = vunpack.c.2.s8 %v648
        %v661 = vunpack.c.3.s8 %v648
        %v662 = vunpack.c.0.s8 %v649
        %v663 = vunpack.c.1.s8 %v649
        %v664 = vunpack.c.2.s8 %v649
        %v665 = vunpack.c.3.s8 %v649
        %v666 = vld [vmem:[%s390] sm:$0x3]
        %v669 = vunpack.c.l.s4 1966171168
        %v670 = vunpack.c.0.s8 %v669
        %v671 = vlaneseq
        %v672 = vshrl.u32 %v671, 7
        %v673 = vsub.s32 %v670, %v672
        %v674 = vrot.slane %v666, %v673
        %v675 = vcombine.high %v674, %v674
        %v676 = vunpack.i.l.s16 %v674
        %v677 = vunpack.i.h.s16 %v674
        %v678 = vunpack.i.l.s16 %v675
        %v679 = vunpack.i.h.s16 %v675
        %v680 = vpack.c.b16 %v676, %v676
        %v681 = vpack.c.b16 %v677, %v677
        %v682 = vpack.c.b16 %v678, %v678
        %v683 = vpack.c.b16 %v679, %v679
        %v688 = vmul.bf16 %v680, 1031814528
        %v689 = vmul.bf16 %v681, 1031814528
        %v690 = vmul.bf16 %v682, 1031814528
        %v691 = vmul.bf16 %v683, 1031814528
        %v692 = vand.u32 %v650, 7
        %v693 = vand.u32 %v651, 7
        %v694 = vand.u32 %v652, 7
        %v695 = vand.u32 %v653, 7
        %v696 = vand.u32 %v654, 7
        %v697 = vand.u32 %v655, 7
        %v698 = vand.u32 %v656, 7
        %v699 = vand.u32 %v657, 7
        %v700 = vand.u32 %v658, 7
        %v701 = vand.u32 %v659, 7
        %v702 = vand.u32 %v660, 7
        %v703 = vand.u32 %v661, 7
        %v704 = vand.u32 %v662, 7
        %v705 = vand.u32 %v663, 7
        %v706 = vand.u32 %v664, 7
        %v707 = vand.u32 %v665, 7
        %v708 = vcvt.s32.f32 %v692
        %v709 = vcvt.s32.f32 %v693
        %v710 = vcvt.s32.f32 %v694
        %v711 = vcvt.s32.f32 %v695
        %v712 = vcvt.s32.f32 %v696
        %v713 = vcvt.s32.f32 %v697
        %v714 = vcvt.s32.f32 %v698
        %v715 = vcvt.s32.f32 %v699
        %v716 = vcvt.s32.f32 %v700
        %v717 = vcvt.s32.f32 %v701
        %v718 = vcvt.s32.f32 %v702
        %v719 = vcvt.s32.f32 %v703
        %v720 = vcvt.s32.f32 %v704
        %v721 = vcvt.s32.f32 %v705
        %v722 = vcvt.s32.f32 %v706
        %v723 = vcvt.s32.f32 %v707
        %v724 = vpack.c.bf16 %v709, %v708
        %v725 = vpack.c.bf16 %v711, %v710
        %v726 = vpack.c.bf16 %v713, %v712
        %v727 = vpack.c.bf16 %v715, %v714
        %v728 = vpack.c.bf16 %v717, %v716
        %v729 = vpack.c.bf16 %v719, %v718
        %v730 = vpack.c.bf16 %v721, %v720
        %v731 = vpack.c.bf16 %v723, %v722
        %v732 = vpack.i.b16 %v676, %v676
        %v733 = vpack.i.b16 %v677, %v677
        %v734 = vpack.i.b16 %v678, %v678
        %v735 = vpack.i.b16 %v679, %v679
        %v736 = vlaneseq
        %v737 = vshrl.u32 %v736, 7
        %v738 = vsub.s32 0, %v737
        %v739 = vrot.slane %v732, %v738
        %v740 = vlaneseq
        %v741 = vshrl.u32 %v740, 7
        %v742 = vsub.s32 0, %v741
        %v743 = vrot.slane %v733, %v742
        %v744 = vlaneseq
        %v745 = vshrl.u32 %v744, 7
        %v746 = vsub.s32 0, %v745
        %v747 = vrot.slane %v734, %v746
        %v748 = vlaneseq
        %v749 = vshrl.u32 %v748, 7
        %v750 = vsub.s32 0, %v749
        %v751 = vrot.slane %v735, %v750
        %v753 = vpack.i.b16 %v739, %v739
        %v755 = vlaneseq
        %v756 = vshrl.u32 %v755, 7
        %v757 = vsub.s32 0, %v756
        %v758 = vrot.slane %v753, %v757
        %v760 = vpack.i.b16 %v743, %v743
        %v762 = vlaneseq
        %v763 = vshrl.u32 %v762, 7
        %v764 = vsub.s32 0, %v763
        %v765 = vrot.slane %v760, %v764
        %v767 = vpack.i.b16 %v747, %v747
        %v769 = vlaneseq
        %v770 = vshrl.u32 %v769, 7
        %v771 = vsub.s32 0, %v770
        %v772 = vrot.slane %v767, %v771
        %v774 = vpack.i.b16 %v751, %v751
        %v776 = vlaneseq
        %v777 = vshrl.u32 %v776, 7
        %v778 = vsub.s32 0, %v777
        %v779 = vrot.slane %v774, %v778
        %v780 = vmul.bf16 %v724, %v758
        %v781 = vmul.bf16 %v725, %v758
        %v782 = vmul.bf16 %v726, %v765
        %v783 = vmul.bf16 %v727, %v765
        %v784 = vmul.bf16 %v728, %v772
        %v785 = vmul.bf16 %v729, %v772
        %v786 = vmul.bf16 %v730, %v779
        %v787 = vmul.bf16 %v731, %v779
        %v788 = vand.u32 %v650, 112
        %v789 = vand.u32 %v651, 112
        %v790 = vand.u32 %v652, 112
        %v791 = vand.u32 %v653, 112
        %v792 = vand.u32 %v654, 112
        %v793 = vand.u32 %v655, 112
        %v794 = vand.u32 %v656, 112
        %v795 = vand.u32 %v657, 112
        %v796 = vand.u32 %v658, 112
        %v797 = vand.u32 %v659, 112
        %v798 = vand.u32 %v660, 112
        %v799 = vand.u32 %v661, 112
        %v800 = vand.u32 %v662, 112
        %v801 = vand.u32 %v663, 112
        %v802 = vand.u32 %v664, 112
        %v803 = vand.u32 %v665, 112
        %v804 = vcvt.s32.f32 %v788
        %v805 = vcvt.s32.f32 %v789
        %v806 = vcvt.s32.f32 %v790
        %v807 = vcvt.s32.f32 %v791
        %v808 = vcvt.s32.f32 %v792
        %v809 = vcvt.s32.f32 %v793
        %v810 = vcvt.s32.f32 %v794
        %v811 = vcvt.s32.f32 %v795
        %v812 = vcvt.s32.f32 %v796
        %v813 = vcvt.s32.f32 %v797
        %v814 = vcvt.s32.f32 %v798
        %v815 = vcvt.s32.f32 %v799
        %v816 = vcvt.s32.f32 %v800
        %v817 = vcvt.s32.f32 %v801
        %v818 = vcvt.s32.f32 %v802
        %v819 = vcvt.s32.f32 %v803
        %v820 = vpack.c.bf16 %v805, %v804
        %v821 = vpack.c.bf16 %v807, %v806
        %v822 = vpack.c.bf16 %v809, %v808
        %v823 = vpack.c.bf16 %v811, %v810
        %v824 = vpack.c.bf16 %v813, %v812
        %v825 = vpack.c.bf16 %v815, %v814
        %v826 = vpack.c.bf16 %v817, %v816
        %v827 = vpack.c.bf16 %v819, %v818
        %v832 = vunpack.c.l.b16 %v688
        %v833 = vunpack.c.l.b16 %v689
        %v834 = vunpack.c.l.b16 %v690
        %v835 = vunpack.c.l.b16 %v691
        %v836 = vpack.i.b16 %v832, %v832
        %v837 = vpack.i.b16 %v833, %v833
        %v838 = vpack.i.b16 %v834, %v834
        %v839 = vpack.i.b16 %v835, %v835
        %v840 = vlaneseq
        %v841 = vshrl.u32 %v840, 7
        %v842 = vsub.s32 0, %v841
        %v843 = vrot.slane %v836, %v842
        %v844 = vlaneseq
        %v845 = vshrl.u32 %v844, 7
        %v846 = vsub.s32 0, %v845
        %v847 = vrot.slane %v837, %v846
        %v848 = vlaneseq
        %v849 = vshrl.u32 %v848, 7
        %v850 = vsub.s32 0, %v849
        %v851 = vrot.slane %v838, %v850
        %v852 = vlaneseq
        %v853 = vshrl.u32 %v852, 7
        %v854 = vsub.s32 0, %v853
        %v855 = vrot.slane %v839, %v854
        %v857 = vpack.i.b16 %v843, %v843
        %v859 = vlaneseq
        %v860 = vshrl.u32 %v859, 7
        %v861 = vsub.s32 0, %v860
        %v862 = vrot.slane %v857, %v861
        %v864 = vpack.i.b16 %v847, %v847
        %v866 = vlaneseq
        %v867 = vshrl.u32 %v866, 7
        %v868 = vsub.s32 0, %v867
        %v869 = vrot.slane %v864, %v868
        %v871 = vpack.i.b16 %v851, %v851
        %v873 = vlaneseq
        %v874 = vshrl.u32 %v873, 7
        %v875 = vsub.s32 0, %v874
        %v876 = vrot.slane %v871, %v875
        %v878 = vpack.i.b16 %v855, %v855
        %v880 = vlaneseq
        %v881 = vshrl.u32 %v880, 7
        %v882 = vsub.s32 0, %v881
        %v883 = vrot.slane %v878, %v882
        %v884 = vmul.bf16 %v820, %v862
        %v885 = vmul.bf16 %v821, %v862
        %v886 = vmul.bf16 %v822, %v869
        %v887 = vmul.bf16 %v823, %v869
        %v888 = vmul.bf16 %v824, %v876
        %v889 = vmul.bf16 %v825, %v876
        %v890 = vmul.bf16 %v826, %v883
        %v891 = vmul.bf16 %v827, %v883
        %v892 = vld [vmem:[%s379] sm:$0xff]
        %v893 = vld [vmem:[%s379 + $0x8] sm:$0xff]
        %v894 = vld [vmem:[#allocation2] sm:$0xff]
        %v895 = vld [vmem:[#allocation2 + $0x8] sm:$0xff]
        %v898 = vunpack.c.l.b16 %v892
        %v899 = vunpack.c.h.b16 %v892
        %v900 = vunpack.c.l.b16 %v893
        %v901 = vunpack.c.h.b16 %v893
        %v902 = vpack.c.b16 %v900, %v898
        %v903 = vpack.c.b16 %v901, %v899
        %906 = vmatprep.subr.bf16.mxu0 0
        %907 = vmatpush1.bf16.msra.mxu0 %v780
        %908 = vmatprep.subr.bf16.mxu0 0
        %909 = vmatpush1.bf16.msra.mxu0 %v781
        %910 = vmatprep.subr.bf16.mxu0 0
        %911 = vmatpush1.bf16.msra.mxu0 %v884
        %912 = vmatprep.subr.bf16.mxu0 0
        %913 = vmatpush1.bf16.msra.mxu0 %v885
        %914 = vmatprep.subr.bf16.mxu0 0
        %915 = vmatpush1.bf16.msra.mxu0 %v782
        %916 = vmatprep.subr.bf16.mxu0 0
        %917 = vmatpush1.bf16.msra.mxu0 %v783
        %918 = vmatprep.subr.bf16.mxu0 0
        %919 = vmatpush1.bf16.msra.mxu0 %v886
        %920 = vmatprep.subr.bf16.mxu0 0
        %921 = vmatpush1.bf16.msra.mxu0 %v887
        %922 = vmatprep.subr.bf16.mxu0 0
        %923 = vmatpush1.bf16.msra.mxu0 %v784
        %924 = vmatprep.subr.bf16.mxu0 0
        %925 = vmatpush1.bf16.msra.mxu0 %v785
        %926 = vmatprep.subr.bf16.mxu0 0
        %927 = vmatpush1.bf16.msra.mxu0 %v888
        %928 = vmatprep.subr.bf16.mxu0 0
        %929 = vmatpush1.bf16.msra.mxu0 %v889
        %930 = vmatprep.subr.bf16.mxu0 0
        %931 = vmatpush1.bf16.msra.mxu0 %v786
        %932 = vmatprep.subr.bf16.mxu0 0
        %933 = vmatpush1.bf16.msra.mxu0 %v787
        %934 = vmatprep.subr.bf16.mxu0 0
        %935 = vmatpush1.bf16.msra.mxu0 %v890
        %936 = vmatprep.subr.bf16.mxu0 0
        %937 = vmatpush1.bf16.msra.mxu0 %v891
        %938 = vmatprep.mubr.bf16.mxu0 %v903
        %939 = vmatmul.mubr.bf16.gmra.mrb[0].mxu0 %v902
        %v940 = vpop.f32.mrb[0].mxu0
        %v941 = vadd.f32 0.0, %v940
        %v942 = vpop.f32.mrb[0].mxu0
        %v943 = vpop.f32.mrb[0].mxu0
        %v944 = vadd.f32 0.0, %v943
        %v945 = vpop.f32.mrb[0].mxu0
        %946 = vdwg.mxu0
        %v947 = vadd.f32 %v894, %v941
        %v948 = vadd.f32 %v895, %v944
        %949 = vst [vmem:[#allocation2] sm:$0xff] %v947
        %950 = vst [vmem:[#allocation2 + $0x8] sm:$0xff] %v948
        // Predicated region
        $region83: #{tpu_custom_call.1} parent=73 // pred_check
          %p951 = pneg %p402
        $region84: #{tpu_custom_call.1} parent=73 // pred_check_branch
          %953 = sbr.rel (%p951) target = $region86
        $region85: #{tpu_custom_call.1} parent=73 // pred_region
          %v954 = vld [vmem:[#allocation2] sm:$0xff]
          %v955 = vld [vmem:[#allocation2 + $0x8] sm:$0xff]
          %v956 = vpack.c.bf16 %v955, %v954
          %v958 = vunpack.c.l.b16 %v956
          %v959 = vunpack.c.h.b16 %v956
          %v960 = vpack.c.b16 %v958, %v958
          %v961 = vpack.c.b16 %v959, %v959
          %964 = vst [vmem:[%s369] sm:$0xf] %v960
          %965 = vst [vmem:[%s369 + $0x4] sm:$0xf] %v961
        $region86: #{tpu_custom_call.1} parent=73 // pred_fallthru
          _
        %s966 = sand.u32 %s181, 1
        %s967 = scalar_lea.sflag [#allocation5], %s966
        %s968 = sand.u32 %s181, 1
        %s969 = smul.addr %s968, 8
        %s970 = scalar_lea.vmem [#allocation4], %s969
        // Predicated region
        $region87: #{tpu_custom_call.1} parent=73 // pred_check
          %p971 = pneg %p191
        $region88: #{tpu_custom_call.1} parent=73 // pred_check_branch
          %973 = sbr.rel (%p971) target = $region90
        $region89: #{tpu_custom_call.1} parent=73 // pred_region
          %s974 = smul.u32 2, %s24
          %s976 = ssub.s32 128, 128
          %977 = vsyncadd %s967, %s976
          %s978 = smul.addr %s974, 2
          %s979 = sadd.s32 %s25, %s978
          %s980 = smul.addr %s979, 64
          %s981 = scalar_lea.hbm %s5, %s980
          %s982 = sshll.u32 %s970, 4
          %s983 = int_to_ptr.vmem [resolvable:$true] %s982
          %988 = dma.vmem_to_hbm [thread:$0]  %s983, 128, %s981, %s967, 64, 128, 4
        $region90: #{tpu_custom_call.1} parent=73 // pred_fallthru
          _
      $region74: #{tpu_custom_call.1} parent=5 // pred_fallthru
        _
      %p989 = scmp.le.s32.totalorder 2, %s14
      // Predicated region
      $region91: #{tpu_custom_call.1} parent=5 // pred_check
        %p990 = pneg %p989
      $region92: #{tpu_custom_call.1} parent=5 // pred_check_branch
        %992 = sbr.rel (%p990) target = $region94
      $region93: #{tpu_custom_call.1} parent=5 // pred_region
        %s993 = ssub.s32 %s14, 2
        // Predicated region
        $region95: #{tpu_custom_call.1} parent=93 // pred_check
          %p994 = pneg %p197
        $region96: #{tpu_custom_call.1} parent=93 // pred_check_branch
          %996 = sbr.rel (%p994) target = $region98
        $region97: #{tpu_custom_call.1} parent=93 // pred_region
          %s997 = sand.u32 %s182, 1
          %s998 = scalar_lea.sflag [#allocation5], %s997
          %s999 = sand.u32 %s182, 1
          %s1000 = smul.addr %s999, 8
          %s1001 = scalar_lea.vmem [#allocation4], %s1000
          %1002 = dma.done %s998, 128
        $region98: #{tpu_custom_call.1} parent=93 // pred_fallthru
          _
      $region94: #{tpu_custom_call.1} parent=5 // pred_fallthru
        _
    $region6: #{tpu_custom_call.1} parent=1 // loop_footer
      %s18 = sadd.s32 1, %s14
    $region7: #{tpu_custom_call.1} parent=1 // loop_footer_branch
      %13 = sbr.rel target = $region3
    $region8: #{tpu_custom_call.1} parent=1 // loop_exit
      _
    %1003 = vsyncpa [#allocation5], 1
    %s1004 = scalar_lea.sflag [#allocation5], 1
    %1005 = vsyncpa %s1004, 1

</llo_original>
